<compile_context>
chip_gen: v7x
topology: tpu7x:2x2x1
jax: 0.10.0
libtpu: 0.0.40
codegen_flags: <defaults>
</compile_context>

<pallas_src>
import jax
import jax.numpy as jnp
from jax.experimental import pallas as pl
from jax.experimental.pallas import tpu as pltpu

_LANES = 128
_BLOCK_BYTES = 2 * 1024 * 1024       # ~2 MiB per input per block (HBM roofline)
_VMEM_BUDGET = 40 * 1024 * 1024      # conservative: fits v7x 64 MiB physical VMEM
_VMEM_LIMIT_CAP = 48 * 1024 * 1024


def _make_kernel(n_valid, block_rows, num_blocks, needs_mask, p_resident):
    inv_n = 1.0 / float(n_valid)
    n_f = float(n_valid)
    last = num_blocks - 1
    full_rows = n_valid // _LANES      # fully-valid rows
    rem_lanes = n_valid % _LANES       # valid lanes in the single partial row

    def kernel(p_ref, t_ref, x_ref, out_ref, acc_p, acc_q, acc_r, sums, *rest):
        p_store = rest[0] if p_resident else None
        pass_idx = pl.program_id(0)    # 0: sums, 1: count + finalize
        blk = pl.program_id(1)

        def tail_mask():
            # Valid-element mask; only ever built for the last (partial) block.
            rid = jax.lax.broadcasted_iota(jnp.int32, (block_rows, _LANES), 0)
            lid = jax.lax.broadcasted_iota(jnp.int32, (block_rows, _LANES), 1)
            row = blk * block_rows + rid
            return jnp.logical_or(
                row < full_rows,
                jnp.logical_and(row == full_rows, lid < rem_lanes))

        def store_p_block(p):
            if num_blocks == 1:
                p_store[...] = p
            else:
                start = pl.multiple_of(blk * block_rows, block_rows)
                p_store[pl.ds(start, block_rows), :] = p

        def load_p_pass1():
            if p_resident:
                if num_blocks == 1:
                    return p_store[...]
                start = pl.multiple_of(blk * block_rows, block_rows)
                return p_store[pl.ds(start, block_rows), :]
            return p_ref[...].astype(jnp.float32)

        # ---------------- pass 0: elementwise partial sums ----------------
        @pl.when(jnp.logical_and(pass_idx == 0, blk == 0))
        def _init0():
            acc_p[...] = jnp.zeros_like(acc_p)
            acc_q[...] = jnp.zeros_like(acc_q)
            acc_r[...] = jnp.zeros_like(acc_r)

        def pass0_body(masked):
            p = p_ref[...].astype(jnp.float32)
            t = t_ref[...].astype(jnp.float32)
            x = x_ref[...].astype(jnp.float32)
            if p_resident:
                store_p_block(p)
            dt = p - t
            dx = p - x
            sq_t = dt * dt
            sq_x = dx * dx
            if masked:
                m = tail_mask()
                p = jnp.where(m, p, 0.0)
                sq_t = jnp.where(m, sq_t, 0.0)
                sq_x = jnp.where(m, sq_x, 0.0)
            acc_p[...] += p
            acc_q[...] += sq_t
            acc_r[...] += sq_x

        if needs_mask:
            @pl.when(jnp.logical_and(pass_idx == 0, blk < last))
            def _p0_full():
                pass0_body(False)

            @pl.when(jnp.logical_and(pass_idx == 0, blk == last))
            def _p0_tail():
                pass0_body(True)
        else:
            @pl.when(pass_idx == 0)
            def _p0():
                pass0_body(False)

        @pl.when(jnp.logical_and(pass_idx == 0, blk == last))
        def _fin0():
            # Single cross-lane reduce per pass (tree-like, close to XLA order).
            sums[0] = jnp.sum(acc_p[...])   # sum(p)
            sums[1] = jnp.sum(acc_q[...])   # sum((p - t)^2)
            sums[2] = jnp.sum(acc_r[...])   # sum((p - x)^2)

        # ---------------- pass 1: count |p - mean| < 0.3 -------------------
        @pl.when(jnp.logical_and(pass_idx == 1, blk == 0))
        def _init1():
            acc_p[...] = jnp.zeros_like(acc_p)   # reused as the count accumulator

        def pass1_body(masked):
            p = load_p_pass1()
            p_mean = sums[0] * inv_n
            lt = (jnp.abs(p - p_mean) < 0.3).astype(jnp.float32)
            if masked:
                lt = jnp.where(tail_mask(), lt, 0.0)
            acc_p[...] += lt

        if needs_mask:
            @pl.when(jnp.logical_and(pass_idx == 1, blk < last))
            def _p1_full():
                pass1_body(False)

            @pl.when(jnp.logical_and(pass_idx == 1, blk == last))
            def _p1_tail():
                pass1_body(True)
        else:
            @pl.when(pass_idx == 1)
            def _p1():
                pass1_body(False)

        @pl.when(jnp.logical_and(pass_idx == 1, blk == last))
        def _fin1():
            # Per-element counts are <= num_blocks; final f32 sum is exact for
            # n <= 2^24 and drifts by at most a few ULPs beyond (negligible in
            # the weighted average below).
            cnt = jnp.sum(acc_p[...])
            mse_pt = sums[1] * inv_n
            mse_px = sums[2] * inv_n
            # Identical to mean(where(|p - mean| < 0.3, mse_pt, mse_px)).
            out_ref[0, 0] = (cnt * mse_pt + (n_f - cnt) * mse_px) * inv_n

    return kernel


def custom_loss(prediction, target, input_data, *,
                max_block_rows=None,
                residency_budget_bytes=_VMEM_BUDGET):
    """JAX/Pallas equivalent of CustomLoss.forward(prediction, target, input_data)."""
    assert prediction.shape == target.shape == input_data.shape
    n = int(prediction.size)
    assert n > 0

    # Stream inputs in their native dtype when supported (bf16 halves HBM bytes);
    # upcast to f32 inside the kernel.
    if (prediction.dtype == target.dtype == input_data.dtype
            and prediction.dtype in (jnp.float32, jnp.bfloat16)):
        stream_dtype = prediction.dtype
    else:
        stream_dtype = jnp.float32

    p = prediction.reshape(-1).astype(stream_dtype)
    t = target.reshape(-1).astype(stream_dtype)
    x = input_data.reshape(-1).astype(stream_dtype)

    if n % _LANES != 0:
        # TODO(synk): a ragged lane tail still requires one pad copy; typical
        # NCHW batches are 128-divisible so this path is rarely taken.
        pad = _LANES - (n % _LANES)
        p = jnp.pad(p, (0, pad))
        t = jnp.pad(t, (0, pad))
        x = jnp.pad(x, (0, pad))

    rows = p.shape[0] // _LANES
    p2 = p.reshape(rows, _LANES)   # reshape of a contiguous flat array: free
    t2 = t.reshape(rows, _LANES)
    x2 = x.reshape(rows, _LANES)

    itemsize = jnp.dtype(stream_dtype).itemsize
    sublane = 8 if itemsize == 4 else 16
    target_rows = _BLOCK_BYTES // (_LANES * itemsize)   # 4096 f32 / 8192 bf16
    if max_block_rows is not None:
        target_rows = min(target_rows,
                          max(sublane, (max_block_rows // sublane) * sublane))
    if rows <= target_rows:
        block_rows = rows              # full extent: always a legal block shape
    else:
        block_rows = target_rows       # multiple of the sublane tile
    num_blocks = -(-rows // block_rows)
    padded_rows = num_blocks * block_rows
    needs_mask = (padded_rows * _LANES) != n

    # VMEM budgeting (double-buffered inputs + vector accumulators + optional
    # resident f32 copy of prediction); conservative enough for v7x (64 MiB).
    acc_bytes = 3 * block_rows * _LANES * 4
    buf_bytes = 3 * 2 * block_rows * _LANES * itemsize
    store_bytes = padded_rows * _LANES * 4
    p_resident = (acc_bytes + buf_bytes + store_bytes) <= residency_budget_bytes
    used = acc_bytes + buf_bytes + (store_bytes if p_resident else 0)
    vmem_limit = min(_VMEM_LIMIT_CAP,
                     max(32 * 1024 * 1024, used + 4 * 1024 * 1024))

    kernel = _make_kernel(n, block_rows, num_blocks, needs_mask, p_resident)

    last = num_blocks - 1
    # t / x (and p when it is VMEM-resident) "park" on their final block during
    # pass 1, so the pipeline issues no DMAs for them in that pass.
    # TODO(synk): confirm with an xprof trace that the parked index_map elides
    # all pass-1 DMAs; if not, split into two pallas_calls instead.
    parked = pl.BlockSpec((block_rows, _LANES),
                          lambda s, i: ((1 - s) * i + s * last, 0))
    if p_resident:
        p_spec = parked
    else:
        p_spec = pl.BlockSpec((block_rows, _LANES), lambda s, i: (i, 0))

    scratch_shapes = [
        pltpu.VMEM((block_rows, _LANES), jnp.float32),   # acc: sum(p) / pass-1 count
        pltpu.VMEM((block_rows, _LANES), jnp.float32),   # acc: sum((p - t)^2)
        pltpu.VMEM((block_rows, _LANES), jnp.float32),   # acc: sum((p - x)^2)
        pltpu.SMEM((3,), jnp.float32),                   # reduced sums
    ]
    if p_resident:
        scratch_shapes.append(pltpu.VMEM((padded_rows, _LANES), jnp.float32))

    grid_spec = pltpu.PrefetchScalarGridSpec(
        num_scalar_prefetch=0,
        grid=(2, num_blocks),
        in_specs=[p_spec, parked, parked],
        out_specs=pl.BlockSpec(memory_space=pltpu.SMEM),   # (1,1) scalar result
        scratch_shapes=scratch_shapes,
    )

    out = pl.pallas_call(
        kernel,
        out_shape=jax.ShapeDtypeStruct((1, 1), jnp.float32),
        grid_spec=grid_spec,
        compiler_params=pltpu.CompilerParams(
            # Both axes are sequential: pass ordering + shared accumulators.
            # TODO(synk): on v7x, shard the block axis across the 2 TensorCores
            # with per-core partial accumulators + a small combine.
            dimension_semantics=("arbitrary", "arbitrary"),
            vmem_limit_bytes=vmem_limit,
        ),
    )(p2, t2, x2)
    return out[0, 0]


def _reference_loss(prediction, target, input_data):
    p = prediction.astype(jnp.float32)
    t = target.astype(jnp.float32)
    x = input_data.astype(jnp.float32)
    p_mean = jnp.mean(p)
    diff = jnp.abs(p - p_mean)
    mse_pt = jnp.mean(jnp.square(p - t))
    mse_px = jnp.mean(jnp.square(p - x))
    return jnp.mean(jnp.where(diff < 0.3, mse_pt, mse_px))


def _make_inputs(key, shape):
    # Prediction values sit in two clusters (|p| ~ 0.1 and ~ 0.6) so that
    # |p - mean(p)| stays far from the hard 0.3 threshold: the where() branch
    # chosen is identical for the kernel and the f32 reference (no ULP-level
    # flips from reduction-order differences), while both select branches are
    # still exercised.
    k_sign, k_mag, k_t, k_x = jax.random.split(key, 4)
    signs = jnp.where(jax.random.bernoulli(k_sign, 0.5, shape), 1.0, -1.0)
    mags = jnp.where(jax.random.bernoulli(k_mag, 0.5, shape), 0.1, 0.6)
    prediction = (signs * mags).astype(jnp.float32)
    target = jax.random.normal(k_t, shape, dtype=jnp.float32)
    input_data = jax.random.normal(k_x, shape, dtype=jnp.float32)
    return prediction, target, input_data


if __name__ == "__main__":
    key = jax.random.PRNGKey(0)
    k0, k1 = jax.random.split(key)

    # Small NCHW tensors consistent with a conv-style pipeline (2048 elements,
    # lane-aligned so no padding path is taken on the default config).
    shape = (2, 4, 16, 16)
    pred, tgt, inp = _make_inputs(k0, shape)
    ref = _reference_loss(pred, tgt, inp)

    # 1) Default config: single lane-aligned block, p resident in VMEM for pass 1.
    loss = custom_loss(pred, tgt, inp)
    jax.block_until_ready(loss)
    assert jnp.allclose(loss, ref, rtol=1e-5, atol=1e-5), (loss, ref)

    # 2) Multi-block path: cross-block accumulation, parked pass-1 DMAs,
    #    dynamic writes into the resident p scratch.
    loss_mb = custom_loss(pred, tgt, inp, max_block_rows=8)
    jax.block_until_ready(loss_mb)
    assert jnp.allclose(loss_mb, ref, rtol=1e-5, atol=1e-5), (loss_mb, ref)

    # 3) Non-resident path: p is re-streamed from HBM in pass 1.
    loss_nr = custom_loss(pred, tgt, inp, residency_budget_bytes=0)
    jax.block_until_ready(loss_nr)
    assert jnp.allclose(loss_nr, ref, rtol=1e-5, atol=1e-5), (loss_nr, ref)

    # 4) Ragged size (210 elements): exercises the tail-mask path.
    shape_r = (2, 3, 5, 7)
    pred_r, tgt_r, inp_r = _make_inputs(k1, shape_r)
    loss_r = custom_loss(pred_r, tgt_r, inp_r)
    jax.block_until_ready(loss_r)
    ref_r = _reference_loss(pred_r, tgt_r, inp_r)
    assert jnp.allclose(loss_r, ref_r, rtol=1e-5, atol=1e-5), (loss_r, ref_r)

    # 5) Native bf16 streaming (inputs stay bf16 in HBM; upcast inside kernel).
    pred_b = pred.astype(jnp.bfloat16)
    tgt_b = tgt.astype(jnp.bfloat16)
    inp_b = inp.astype(jnp.bfloat16)
    loss_b = custom_loss(pred_b, tgt_b, inp_b)
    jax.block_until_ready(loss_b)
    ref_b = _reference_loss(pred_b, tgt_b, inp_b)
    assert jnp.allclose(loss_b, ref_b, rtol=1e-4, atol=1e-4), (loss_b, ref_b)

    print("KERNEL_OK")
</pallas_src>

<mosaic_0001>
module attributes {stable_mosaic.version = 11 : i64} {
  func.func @kernel(%arg0: i32, %arg1: i32, %arg2: memref<16x128xf32, #tpu.memory_space<vmem>>, %arg3: memref<16x128xf32, #tpu.memory_space<vmem>>, %arg4: memref<16x128xf32, #tpu.memory_space<vmem>>, %arg5: memref<1x1xf32, #tpu.memory_space<smem>>, %arg6: memref<16x128xf32, #tpu.memory_space<vmem>>, %arg7: memref<16x128xf32, #tpu.memory_space<vmem>>, %arg8: memref<16x128xf32, #tpu.memory_space<vmem>>, %arg9: memref<3xf32, #tpu.memory_space<smem>>, %arg10: memref<16x128xf32, #tpu.memory_space<vmem>>) attributes {dimension_semantics = [#tpu.dimension_semantics<arbitrary>, #tpu.dimension_semantics<arbitrary>], iteration_bounds = array<i64: 2, 1>, scalar_prefetch = 0 : i64, scratch_operands = 5 : i64, tpu.core_type = #tpu.core_type<tc>, window_params = [{transform_indices = @transform_0, window_bounds = array<i64: 16, 128>}, {transform_indices = @transform_1, window_bounds = array<i64: 16, 128>}, {transform_indices = @transform_2, window_bounds = array<i64: 16, 128>}, {transform_indices = @transform_3, window_bounds = array<i64: 1, 1>}]} {
    %c0_i32 = arith.constant 0 : i32
    %0 = arith.cmpi eq, %arg0, %c0_i32 : i32
    %c0_i32_0 = arith.constant 0 : i32
    %1 = arith.cmpi eq, %arg1, %c0_i32_0 : i32
    %2 = arith.andi %0, %1 : i1
    %3 = arith.extui %2 : i1 to i32
    %c0_i32_1 = arith.constant 0 : i32
    %4 = arith.cmpi ne, %3, %c0_i32_1 : i32
    scf.if %4 {
      %cst = arith.constant 0.000000e+00 : f32
      %26 = vector.broadcast %cst : f32 to vector<16x128xf32>
      %c0 = arith.constant 0 : index
      %c0_14 = arith.constant 0 : index
      %27 = vector.load %arg6[%c0, %c0_14] : memref<16x128xf32, #tpu.memory_space<vmem>>, vector<16x128xf32>
      tpu.vector_store %arg6[%c0, %c0_14], %26 {strides = array<i32>} : memref<16x128xf32, #tpu.memory_space<vmem>>, vector<16x128xf32>,
      %cst_15 = arith.constant 0.000000e+00 : f32
      %28 = vector.broadcast %cst_15 : f32 to vector<16x128xf32>
      %c0_16 = arith.constant 0 : index
      %c0_17 = arith.constant 0 : index
      %29 = vector.load %arg7[%c0_16, %c0_17] : memref<16x128xf32, #tpu.memory_space<vmem>>, vector<16x128xf32>
      tpu.vector_store %arg7[%c0_16, %c0_17], %28 {strides = array<i32>} : memref<16x128xf32, #tpu.memory_space<vmem>>, vector<16x128xf32>,
      %cst_18 = arith.constant 0.000000e+00 : f32
      %30 = vector.broadcast %cst_18 : f32 to vector<16x128xf32>
      %c0_19 = arith.constant 0 : index
      %c0_20 = arith.constant 0 : index
      %31 = vector.load %arg8[%c0_19, %c0_20] : memref<16x128xf32, #tpu.memory_space<vmem>>, vector<16x128xf32>
      tpu.vector_store %arg8[%c0_19, %c0_20], %30 {strides = array<i32>} : memref<16x128xf32, #tpu.memory_space<vmem>>, vector<16x128xf32>,
    } else {
    }
    %c0_i32_2 = arith.constant 0 : i32
    %5 = arith.cmpi eq, %arg0, %c0_i32_2 : i32
    %6 = arith.extui %5 : i1 to i32
    %c0_i32_3 = arith.constant 0 : i32
    %7 = arith.cmpi ne, %6, %c0_i32_3 : i32
    scf.if %7 {
      %c0 = arith.constant 0 : index
      %c0_14 = arith.constant 0 : index
      %26 = vector.load %arg2[%c0, %c0_14] : memref<16x128xf32, #tpu.memory_space<vmem>>, vector<16x128xf32>
      %c0_15 = arith.constant 0 : index
      %c0_16 = arith.constant 0 : index
      %27 = vector.load %arg3[%c0_15, %c0_16] : memref<16x128xf32, #tpu.memory_space<vmem>>, vector<16x128xf32>
      %c0_17 = arith.constant 0 : index
      %c0_18 = arith.constant 0 : index
      %28 = vector.load %arg4[%c0_17, %c0_18] : memref<16x128xf32, #tpu.memory_space<vmem>>, vector<16x128xf32>
      %c0_19 = arith.constant 0 : index
      %c0_20 = arith.constant 0 : index
      %29 = vector.load %arg10[%c0_19, %c0_20] : memref<16x128xf32, #tpu.memory_space<vmem>>, vector<16x128xf32>
      tpu.vector_store %arg10[%c0_19, %c0_20], %26 {strides = array<i32>} : memref<16x128xf32, #tpu.memory_space<vmem>>, vector<16x128xf32>,
      %30 = arith.subf %26, %27 : vector<16x128xf32>
      %31 = arith.subf %26, %28 : vector<16x128xf32>
      %32 = arith.mulf %30, %30 : vector<16x128xf32>
      %33 = arith.mulf %31, %31 : vector<16x128xf32>
      %c0_21 = arith.constant 0 : index
      %c0_22 = arith.constant 0 : index
      %34 = vector.load %arg6[%c0_21, %c0_22] : memref<16x128xf32, #tpu.memory_space<vmem>>, vector<16x128xf32>
      %35 = arith.addf %34, %26 : vector<16x128xf32>
      %c0_23 = arith.constant 0 : index
      %c0_24 = arith.constant 0 : index
      %36 = vector.load %arg6[%c0_23, %c0_24] : memref<16x128xf32, #tpu.memory_space<vmem>>, vector<16x128xf32>
      tpu.vector_store %arg6[%c0_23, %c0_24], %35 {strides = array<i32>} : memref<16x128xf32, #tpu.memory_space<vmem>>, vector<16x128xf32>,
      %c0_25 = arith.constant 0 : index
      %c0_26 = arith.constant 0 : index
      %37 = vector.load %arg7[%c0_25, %c0_26] : memref<16x128xf32, #tpu.memory_space<vmem>>, vector<16x128xf32>
      %38 = arith.addf %37, %32 : vector<16x128xf32>
      %c0_27 = arith.constant 0 : index
      %c0_28 = arith.constant 0 : index
      %39 = vector.load %arg7[%c0_27, %c0_28] : memref<16x128xf32, #tpu.memory_space<vmem>>, vector<16x128xf32>
      tpu.vector_store %arg7[%c0_27, %c0_28], %38 {strides = array<i32>} : memref<16x128xf32, #tpu.memory_space<vmem>>, vector<16x128xf32>,
      %c0_29 = arith.constant 0 : index
      %c0_30 = arith.constant 0 : index
      %40 = vector.load %arg8[%c0_29, %c0_30] : memref<16x128xf32, #tpu.memory_space<vmem>>, vector<16x128xf32>
      %41 = arith.addf %40, %33 : vector<16x128xf32>
      %c0_31 = arith.constant 0 : index
      %c0_32 = arith.constant 0 : index
      %42 = vector.load %arg8[%c0_31, %c0_32] : memref<16x128xf32, #tpu.memory_space<vmem>>, vector<16x128xf32>
      tpu.vector_store %arg8[%c0_31, %c0_32], %41 {strides = array<i32>} : memref<16x128xf32, #tpu.memory_space<vmem>>, vector<16x128xf32>,
    } else {
    }
    %c0_i32_4 = arith.constant 0 : i32
    %8 = arith.cmpi eq, %arg0, %c0_i32_4 : i32
    %c0_i32_5 = arith.constant 0 : i32
    %9 = arith.cmpi eq, %arg1, %c0_i32_5 : i32
    %10 = arith.andi %8, %9 : i1
    %11 = arith.extui %10 : i1 to i32
    %c0_i32_6 = arith.constant 0 : i32
    %12 = arith.cmpi ne, %11, %c0_i32_6 : i32
    scf.if %12 {
      %c0 = arith.constant 0 : index
      %c0_14 = arith.constant 0 : index
      %26 = vector.load %arg6[%c0, %c0_14] : memref<16x128xf32, #tpu.memory_space<vmem>>, vector<16x128xf32>
      %27 = vector.shape_cast %26 : vector<16x128xf32> to vector<1x16x128xf32>
      %cst = arith.constant dense<0.000000e+00> : vector<1xf32>
      %28 = vector.multi_reduction <add>, %27, %cst [1, 2] : vector<1x16x128xf32> to vector<1xf32>
      %29 = vector.shape_cast %28 : vector<1xf32> to vector<1x1x1xf32>
      %30 = vector.extract %29[0, 0, 0] : f32 from vector<1x1x1xf32>
      %c0_15 = arith.constant 0 : index
      %31 = memref.load %arg9[%c0_15] : memref<3xf32, #tpu.memory_space<smem>>
      memref.store %30, %arg9[%c0_15] : memref<3xf32, #tpu.memory_space<smem>>
      %c0_16 = arith.constant 0 : index
      %c0_17 = arith.constant 0 : index
      %32 = vector.load %arg7[%c0_16, %c0_17] : memref<16x128xf32, #tpu.memory_space<vmem>>, vector<16x128xf32>
      %33 = vector.shape_cast %32 : vector<16x128xf32> to vector<1x16x128xf32>
      %cst_18 = arith.constant dense<0.000000e+00> : vector<1xf32>
      %34 = vector.multi_reduction <add>, %33, %cst_18 [1, 2] : vector<1x16x128xf32> to vector<1xf32>
      %35 = vector.shape_cast %34 : vector<1xf32> to vector<1x1x1xf32>
      %36 = vector.extract %35[0, 0, 0] : f32 from vector<1x1x1xf32>
      %c1 = arith.constant 1 : index
      %37 = memref.load %arg9[%c1] : memref<3xf32, #tpu.memory_space<smem>>
      memref.store %36, %arg9[%c1] : memref<3xf32, #tpu.memory_space<smem>>
      %c0_19 = arith.constant 0 : index
      %c0_20 = arith.constant 0 : index
      %38 = vector.load %arg8[%c0_19, %c0_20] : memref<16x128xf32, #tpu.memory_space<vmem>>, vector<16x128xf32>
      %39 = vector.shape_cast %38 : vector<16x128xf32> to vector<1x16x128xf32>
      %cst_21 = arith.constant dense<0.000000e+00> : vector<1xf32>
      %40 = vector.multi_reduction <add>, %39, %cst_21 [1, 2] : vector<1x16x128xf32> to vector<1xf32>
      %41 = vector.shape_cast %40 : vector<1xf32> to vector<1x1x1xf32>
      %42 = vector.extract %41[0, 0, 0] : f32 from vector<1x1x1xf32>
      %c2 = arith.constant 2 : index
      %43 = memref.load %arg9[%c2] : memref<3xf32, #tpu.memory_space<smem>>
      memref.store %42, %arg9[%c2] : memref<3xf32, #tpu.memory_space<smem>>
    } else {
    }
    %c1_i32 = arith.constant 1 : i32
    %13 = arith.cmpi eq, %arg0, %c1_i32 : i32
    %c0_i32_7 = arith.constant 0 : i32
    %14 = arith.cmpi eq, %arg1, %c0_i32_7 : i32
    %15 = arith.andi %13, %14 : i1
    %16 = arith.extui %15 : i1 to i32
    %c0_i32_8 = arith.constant 0 : i32
    %17 = arith.cmpi ne, %16, %c0_i32_8 : i32
    scf.if %17 {
      %cst = arith.constant 0.000000e+00 : f32
      %26 = vector.broadcast %cst : f32 to vector<16x128xf32>
      %c0 = arith.constant 0 : index
      %c0_14 = arith.constant 0 : index
      %27 = vector.load %arg6[%c0, %c0_14] : memref<16x128xf32, #tpu.memory_space<vmem>>, vector<16x128xf32>
      tpu.vector_store %arg6[%c0, %c0_14], %26 {strides = array<i32>} : memref<16x128xf32, #tpu.memory_space<vmem>>, vector<16x128xf32>,
    } else {
    }
    %c1_i32_9 = arith.constant 1 : i32
    %18 = arith.cmpi eq, %arg0, %c1_i32_9 : i32
    %19 = arith.extui %18 : i1 to i32
    %c0_i32_10 = arith.constant 0 : i32
    %20 = arith.cmpi ne, %19, %c0_i32_10 : i32
    scf.if %20 {
      %c0 = arith.constant 0 : index
      %c0_14 = arith.constant 0 : index
      %26 = vector.load %arg10[%c0, %c0_14] : memref<16x128xf32, #tpu.memory_space<vmem>>, vector<16x128xf32>
      %c0_15 = arith.constant 0 : index
      %27 = memref.load %arg9[%c0_15] : memref<3xf32, #tpu.memory_space<smem>>
      %cst = arith.constant 4.8828125E-4 : f32
      %28 = arith.mulf %27, %cst : f32
      %29 = vector.broadcast %28 : f32 to vector<16x128xf32>
      %30 = arith.subf %26, %29 : vector<16x128xf32>
      %31 = math.absf %30 : vector<16x128xf32>
      %cst_16 = arith.constant 3.000000e-01 : f32
      %32 = vector.broadcast %cst_16 : f32 to vector<16x128xf32>
      %33 = arith.cmpf olt, %31, %32 : vector<16x128xf32>
      %34 = arith.extui %33 : vector<16x128xi1> to vector<16x128xi32>
      %35 = arith.sitofp %34 : vector<16x128xi32> to vector<16x128xf32>
      %c0_17 = arith.constant 0 : index
      %c0_18 = arith.constant 0 : index
      %36 = vector.load %arg6[%c0_17, %c0_18] : memref<16x128xf32, #tpu.memory_space<vmem>>, vector<16x128xf32>
      %37 = arith.addf %36, %35 : vector<16x128xf32>
      %c0_19 = arith.constant 0 : index
      %c0_20 = arith.constant 0 : index
      %38 = vector.load %arg6[%c0_19, %c0_20] : memref<16x128xf32, #tpu.memory_space<vmem>>, vector<16x128xf32>
      tpu.vector_store %arg6[%c0_19, %c0_20], %37 {strides = array<i32>} : memref<16x128xf32, #tpu.memory_space<vmem>>, vector<16x128xf32>,
    } else {
    }
    %c1_i32_11 = arith.constant 1 : i32
    %21 = arith.cmpi eq, %arg0, %c1_i32_11 : i32
    %c0_i32_12 = arith.constant 0 : i32
    %22 = arith.cmpi eq, %arg1, %c0_i32_12 : i32
    %23 = arith.andi %21, %22 : i1
    %24 = arith.extui %23 : i1 to i32
    %c0_i32_13 = arith.constant 0 : i32
    %25 = arith.cmpi ne, %24, %c0_i32_13 : i32
    scf.if %25 {
      %c0 = arith.constant 0 : index
      %c0_14 = arith.constant 0 : index
      %26 = vector.load %arg6[%c0, %c0_14] : memref<16x128xf32, #tpu.memory_space<vmem>>, vector<16x128xf32>
      %27 = vector.shape_cast %26 : vector<16x128xf32> to vector<1x16x128xf32>
      %cst = arith.constant dense<0.000000e+00> : vector<1xf32>
      %28 = vector.multi_reduction <add>, %27, %cst [1, 2] : vector<1x16x128xf32> to vector<1xf32>
      %29 = vector.shape_cast %28 : vector<1xf32> to vector<1x1x1xf32>
      %30 = vector.extract %29[0, 0, 0] : f32 from vector<1x1x1xf32>
      %c1 = arith.constant 1 : index
      %31 = memref.load %arg9[%c1] : memref<3xf32, #tpu.memory_space<smem>>
      %cst_15 = arith.constant 4.8828125E-4 : f32
      %32 = arith.mulf %31, %cst_15 : f32
      %c2 = arith.constant 2 : index
      %33 = memref.load %arg9[%c2] : memref<3xf32, #tpu.memory_space<smem>>
      %cst_16 = arith.constant 4.8828125E-4 : f32
      %34 = arith.mulf %33, %cst_16 : f32
      %35 = arith.mulf %30, %32 : f32
      %cst_17 = arith.constant 2.048000e+03 : f32
      %36 = arith.subf %cst_17, %30 : f32
      %37 = arith.mulf %36, %34 : f32
      %38 = arith.addf %35, %37 : f32
      %cst_18 = arith.constant 4.8828125E-4 : f32
      %39 = arith.mulf %38, %cst_18 : f32
      %c0_19 = arith.constant 0 : index
      %c0_20 = arith.constant 0 : index
      %40 = memref.load %arg5[%c0_19, %c0_20] : memref<1x1xf32, #tpu.memory_space<smem>>
      memref.store %39, %arg5[%c0_19, %c0_20] : memref<1x1xf32, #tpu.memory_space<smem>>
    } else {
    }
    return
  }
  func.func @transform_0(%arg0: i32, %arg1: i32) -> (i32, i32) {
    %c1_i32 = arith.constant 1 : i32
    %0 = arith.subi %c1_i32, %arg0 : i32
    %1 = arith.muli %0, %arg1 : i32
    %c0_i32 = arith.constant 0 : i32
    %2 = arith.muli %arg0, %c0_i32 : i32
    %3 = arith.addi %1, %2 : i32
    %c0_i32_0 = arith.constant 0 : i32
    %c0_i32_1 = arith.constant 0 : i32
    return %3, %c0_i32_0 : i32, i32
  }
  func.func @transform_1(%arg0: i32, %arg1: i32) -> (i32, i32) {
    %c1_i32 = arith.constant 1 : i32
    %0 = arith.subi %c1_i32, %arg0 : i32
    %1 = arith.muli %0, %arg1 : i32
    %c0_i32 = arith.constant 0 : i32
    %2 = arith.muli %arg0, %c0_i32 : i32
    %3 = arith.addi %1, %2 : i32
    %c0_i32_0 = arith.constant 0 : i32
    %c0_i32_1 = arith.constant 0 : i32
    return %3, %c0_i32_0 : i32, i32
  }
  func.func @transform_2(%arg0: i32, %arg1: i32) -> (i32, i32) {
    %c1_i32 = arith.constant 1 : i32
    %0 = arith.subi %c1_i32, %arg0 : i32
    %1 = arith.muli %0, %arg1 : i32
    %c0_i32 = arith.constant 0 : i32
    %2 = arith.muli %arg0, %c0_i32 : i32
    %3 = arith.addi %1, %2 : i32
    %c0_i32_0 = arith.constant 0 : i32
    %c0_i32_1 = arith.constant 0 : i32
    return %3, %c0_i32_0 : i32, i32
  }
  func.func @transform_3(%arg0: i32, %arg1: i32) -> (i32, i32) {
    %c0_i32 = arith.constant 0 : i32
    %c0_i32_0 = arith.constant 0 : i32
    %c0_i32_1 = arith.constant 0 : i32
    return %c0_i32, %c0_i32_0 : i32, i32
  }
}

</mosaic_0001>

<llo_original>
// kernel: tpu_custom_call.1
$region0: #{tpu_custom_call.1}
  #allocation0 [shape = 'u32[]', space=smem, size = 0x4, offset = 0x4, fixed_abs, tag = 'smem constant byte address 0x4 - core index']
  #allocation1 [shape = 'u32[144,128]{1,0:T(1,128)}', space=vmem, size = 0x12000, scoped, tag = 'internal scratch']
  #allocation2 [shape = 'f32[16,128]{1,0:T(8,128)}', space=vmem, size = 0x2000, scoped, tag = 'scratch operand']
  #allocation3 [shape = 'f32[16,128]{1,0:T(8,128)}', space=vmem, size = 0x2000, scoped, tag = 'scratch operand']
  #allocation4 [shape = 'f32[16,128]{1,0:T(8,128)}', space=vmem, size = 0x2000, scoped, tag = 'scratch operand']
  #allocation5 [shape = 'f32[3]{0:T(128)}', space=smem, size = 0x200, scoped, tag = 'scratch operand']
  #allocation6 [shape = 'f32[16,128]{1,0:T(8,128)}', space=vmem, size = 0x2000, scoped, tag = 'scratch operand']
  %s0 = inlined_call_operand.hbm [shape: f32[16,128], index: 0, kind: input, shape index: {}]
  %s1 = inlined_call_operand.hbm [shape: f32[16,128], index: 1, kind: input, shape index: {}]
  %s2 = inlined_call_operand.hbm [shape: f32[16,128], index: 2, kind: input, shape index: {}]
  %s3 = inlined_call_operand.hbm [shape: f32[1,1], index: 3, kind: output, shape index: {}]
  %s4 = sld [smem:[#allocation0]]
  $region81: #{tpu_custom_call.1} parent=0
    _
  %s6 = ssub.s32 1, %s4
  %s7 = scalar_select 0, %s6, %s4
  $region1: #{tpu_custom_call.1} parent=0
    #allocation7 [shape = 'u8[16384]{0}', space=vmem, size = 0x4000, scoped, tag = 'input window, operand 0']
    #allocation8 [shape = 's32[2]{0}', space=sflag, size = 0x8, scoped, tag = 'scoped memory for tpu_custom_call.1']
    #allocation9 [shape = 's32[2]{0}', space=sflag, size = 0x8, scoped, tag = 'scoped memory for tpu_custom_call.1']
    #allocation10 [shape = 'u8[16384]{0}', space=vmem, size = 0x4000, scoped, tag = 'input window, operand 1']
    #allocation11 [shape = 's32[2]{0}', space=sflag, size = 0x8, scoped, tag = 'scoped memory for tpu_custom_call.1']
    #allocation12 [shape = 'u8[16384]{0}', space=vmem, size = 0x4000, scoped, tag = 'input window, operand 2']
    #allocation13 [shape = 'u8[512]{0}', space=smem, size = 0x200, scoped, tag = 'output window, operand 0, single buffered']
    %8 = vsyncpa [#allocation8], 0
    %s9 = scalar_lea.sflag [#allocation8], 1
    %10 = vsyncpa %s9, 0
    %11 = vsyncpa [#allocation11], 0
    %s12 = scalar_lea.sflag [#allocation11], 1
    %13 = vsyncpa %s12, 0
    %14 = vsyncpa [#allocation9], 0
    loop: start=0, step=1, limit=4
    $region2: #{tpu_custom_call.1} parent=1 // loop_pre_header
      _
    $region3: #{tpu_custom_call.1} parent=1 // loop_header
      %s16 = sphi 0, %s20
      %p17 = scmp.ge.s32.totalorder %s16, 4
      %s23 = sphi 0, %s35
      %s24 = sphi 0, %s31
      %s25 = sphi 0, %s23
      %s26 = sphi 0, %s24
      %s27 = sphi 0, %s25
      %s28 = sphi 0, %s26
      %s42 = sphi 0, %s44
      %s45 = sphi 0, %s42
      %s46 = sphi 0, %s45
      %s62 = sphi 0, %s46
      %s72 = sphi 0, %s74
      %s75 = sphi 0, %s72
      %s76 = sphi 0, %s75
      %s92 = sphi 0, %s76
      %s102 = sphi 0, %s104
      %s105 = sphi 0, %s102
      %s106 = sphi 0, %s105
      %s122 = sphi 0, %s106
      %s126 = sphi 0, %s126
      %s128 = sphi 0, %s126
      %s129 = sphi 0, %s128
      %s143 = sphi 0, %s129
    $region4: #{tpu_custom_call.1} parent=1 // loop_header_branch
      %19 = sbr.rel (%p17) target = $region8
    $region5: #{tpu_custom_call.1} parent=1 // loop_body
      %s21 = ssub.s32 %s16, 1
      %s22 = ssub.s32 %s16, 2
      %s29 = sadd.s32 1, %s24
      %p30 = scmp.ge.s32.totalorder %s29, 1
      %s31 = scalar_select %p30, 0, %s29
      %s32 = sadd.s32 1, %s23
      %s33 = scalar_select %p30, %s32, %s23
      %p34 = scmp.ge.s32.totalorder %s33, 2
      %s35 = scalar_select %p34, 0, %s33
      %s36 = ssub.s32 1, %s23
      %s37 = smul.u32 %s36, %s24
      %s38 = ssub.s32 1, %s35
      %s39 = smul.u32 %s38, %s31
      %s40 = ssub.s32 %s37, %s39
      %p41 = scmp.eq.s32.totalorder %s40, 0
      %s43 = sadd.s32 %s42, 1
      %s44 = scalar_select %p41, %s42, %s43
      %p47 = pneg %p41
      %p48 = scmp.eq.s32.totalorder %s16, 1
      %p49 = por %p47, %p48
      %p50 = scmp.ne.s32.totalorder %s42, %s45
      %p51 = scmp.eq.s32.totalorder %s16, 0
      %p52 = por %p50, %p51
      %p53 = scmp.ne.s32.totalorder %s42, %s45
      %p54 = scmp.eq.s32.totalorder %s21, 1
      %p55 = por %p53, %p54
      %p56 = scmp.ne.s32.totalorder %s45, %s46
      %p57 = scmp.eq.s32.totalorder %s21, 0
      %p58 = por %p56, %p57
      %p59 = scmp.ne.s32.totalorder %s45, %s46
      %p60 = scmp.eq.s32.totalorder %s22, 1
      %p61 = por %p59, %p60
      %p63 = scmp.ne.s32.totalorder %s46, %s62
      %p64 = scmp.eq.s32.totalorder %s22, 0
      %p65 = por %p63, %p64
      %s66 = ssub.s32 1, %s23
      %s67 = smul.u32 %s66, %s24
      %s68 = ssub.s32 1, %s35
      %s69 = smul.u32 %s68, %s31
      %s70 = ssub.s32 %s67, %s69
      %p71 = scmp.eq.s32.totalorder %s70, 0
      %s73 = sadd.s32 %s72, 1
      %s74 = scalar_select %p71, %s72, %s73
      %p77 = pneg %p71
      %p78 = scmp.eq.s32.totalorder %s16, 1
      %p79 = por %p77, %p78
      %p80 = scmp.ne.s32.totalorder %s72, %s75
      %p81 = scmp.eq.s32.totalorder %s16, 0
      %p82 = por %p80, %p81
      %p83 = scmp.ne.s32.totalorder %s72, %s75
      %p84 = scmp.eq.s32.totalorder %s21, 1
      %p85 = por %p83, %p84
      %p86 = scmp.ne.s32.totalorder %s75, %s76
      %p87 = scmp.eq.s32.totalorder %s21, 0
      %p88 = por %p86, %p87
      %p89 = scmp.ne.s32.totalorder %s75, %s76
      %p90 = scmp.eq.s32.totalorder %s22, 1
      %p91 = por %p89, %p90
      %p93 = scmp.ne.s32.totalorder %s76, %s92
      %p94 = scmp.eq.s32.totalorder %s22, 0
      %p95 = por %p93, %p94
      %s96 = ssub.s32 1, %s23
      %s97 = smul.u32 %s96, %s24
      %s98 = ssub.s32 1, %s35
      %s99 = smul.u32 %s98, %s31
      %s100 = ssub.s32 %s97, %s99
      %p101 = scmp.eq.s32.totalorder %s100, 0
      %s103 = sadd.s32 %s102, 1
      %s104 = scalar_select %p101, %s102, %s103
      %p107 = pneg %p101
      %p108 = scmp.eq.s32.totalorder %s16, 1
      %p109 = por %p107, %p108
      %p110 = scmp.ne.s32.totalorder %s102, %s105
      %p111 = scmp.eq.s32.totalorder %s16, 0
      %p112 = por %p110, %p111
      %p113 = scmp.ne.s32.totalorder %s102, %s105
      %p114 = scmp.eq.s32.totalorder %s21, 1
      %p115 = por %p113, %p114
      %p116 = scmp.ne.s32.totalorder %s105, %s106
      %p117 = scmp.eq.s32.totalorder %s21, 0
      %p118 = por %p116, %p117
      %p119 = scmp.ne.s32.totalorder %s105, %s106
      %p120 = scmp.eq.s32.totalorder %s22, 1
      %p121 = por %p119, %p120
      %p123 = scmp.ne.s32.totalorder %s106, %s122
      %p124 = scmp.eq.s32.totalorder %s22, 0
      %p125 = por %p123, %p124
      %s127 = sadd.s32 %s126, 1
      %p130 = scmp.eq.s32.totalorder %s16, 1
      %p131 = scmp.ne.s32.totalorder %s126, %s128
      %p132 = scmp.eq.s32.totalorder %s16, 0
      %p133 = por %p131, %p132
      %p134 = scmp.ne.s32.totalorder %s126, %s128
      %p135 = scmp.eq.s32.totalorder %s21, 1
      %p136 = por %p134, %p135
      %p137 = scmp.ne.s32.totalorder %s128, %s129
      %p138 = scmp.eq.s32.totalorder %s21, 0
      %p139 = por %p137, %p138
      %p140 = scmp.ne.s32.totalorder %s128, %s129
      %p141 = scmp.eq.s32.totalorder %s22, 1
      %p142 = por %p140, %p141
      %p144 = scmp.ne.s32.totalorder %s129, %s143
      %p145 = scmp.eq.s32.totalorder %s22, 0
      %p146 = por %p144, %p145
      %p147 = scmp.le.s32.totalorder 1, %s16
      %p148 = scmp.lt.s32.totalorder %s16, 3
      %p149 = pnand %p147, %p148
      %p150 = pneg %p149
      // Predicated region
      $region9: #{tpu_custom_call.1} parent=5 // pred_check
        _
      $region10: #{tpu_custom_call.1} parent=5 // pred_check_branch
        %152 = sbr.rel (%p149) target = $region12
      $region11: #{tpu_custom_call.1} parent=5 // pred_region
        %s153 = ssub.s32 %s16, 1
      $region12: #{tpu_custom_call.1} parent=5 // pred_fallthru
        _
      %p154 = scmp.lt.s32.totalorder %s16, 2
      // Predicated region
      $region13: #{tpu_custom_call.1} parent=5 // pred_check
        %p155 = pneg %p154
      $region14: #{tpu_custom_call.1} parent=5 // pred_check_branch
        %157 = sbr.rel (%p155) target = $region16
      $region15: #{tpu_custom_call.1} parent=5 // pred_region
        // Predicated region
        $region17: #{tpu_custom_call.1} parent=15 // pred_check
          %p158 = pneg %p52
        $region18: #{tpu_custom_call.1} parent=15 // pred_check_branch
          %160 = sbr.rel (%p158) target = $region20
        $region19: #{tpu_custom_call.1} parent=15 // pred_region
          %s161 = sand.u32 %s42, 1
          %s162 = scalar_lea.sflag [#allocation8], %s161
          %s163 = sand.u32 %s42, 1
          %s164 = smul.addr %s163, 16
          %s165 = scalar_lea.vmem [#allocation7], %s164
          %s166 = ssub.s32 1, %s23
          %s167 = smul.u32 %s166, %s24
          %s168 = smul.u32 2, %s167
          %s170 = ssub.s32 256, 256
          %171 = vsyncadd %s162, %s170
          %s172 = smul.addr %s168, 128
          %s173 = scalar_lea.hbm %s0, %s172
          %s174 = sshll.u32 %s165, 4
          %s175 = int_to_ptr.vmem [resolvable:$true] %s174
          %180 = dma.hbm_to_vmem [thread:$0]  %s173, 256, %s175, %s162, 128, 128, 8
        $region20: #{tpu_custom_call.1} parent=15 // pred_fallthru
          _
        // Predicated region
        $region21: #{tpu_custom_call.1} parent=15 // pred_check
          %p181 = pneg %p82
        $region22: #{tpu_custom_call.1} parent=15 // pred_check_branch
          %183 = sbr.rel (%p181) target = $region24
        $region23: #{tpu_custom_call.1} parent=15 // pred_region
          %s184 = sand.u32 %s16, 1
          %s185 = scalar_lea.sflag [#allocation11], %s184
          %s186 = sand.u32 %s72, 1
          %s187 = smul.addr %s186, 16
          %s188 = scalar_lea.vmem [#allocation10], %s187
          %s189 = ssub.s32 1, %s23
          %s190 = smul.u32 %s189, %s24
          %s191 = smul.u32 2, %s190
          %s193 = ssub.s32 256, 256
          %194 = vsyncadd %s185, %s193
          %s195 = smul.addr %s191, 128
          %s196 = scalar_lea.hbm %s1, %s195
          %s197 = sshll.u32 %s188, 4
          %s198 = int_to_ptr.vmem [resolvable:$true] %s197
          %203 = dma.hbm_to_vmem [thread:$0]  %s196, 256, %s198, %s185, 128, 128, 8
        $region24: #{tpu_custom_call.1} parent=15 // pred_fallthru
          _
        // Predicated region
        $region25: #{tpu_custom_call.1} parent=15 // pred_check
          %p204 = pneg %p112
        $region26: #{tpu_custom_call.1} parent=15 // pred_check_branch
          %206 = sbr.rel (%p204) target = $region28
        $region27: #{tpu_custom_call.1} parent=15 // pred_region
          %s207 = sand.u32 %s16, 1
          %s208 = scalar_lea.sflag [#allocation11], %s207
          %s209 = sand.u32 %s102, 1
          %s210 = smul.addr %s209, 16
          %s211 = scalar_lea.vmem [#allocation12], %s210
          %s212 = ssub.s32 1, %s23
          %s213 = smul.u32 %s212, %s24
          %s214 = smul.u32 2, %s213
          %s216 = ssub.s32 256, 256
          %217 = vsyncadd %s208, %s216
          %s218 = smul.addr %s214, 128
          %s219 = scalar_lea.hbm %s2, %s218
          %s220 = sshll.u32 %s211, 4
          %s221 = int_to_ptr.vmem [resolvable:$true] %s220
          %226 = dma.hbm_to_vmem [thread:$0]  %s219, 256, %s221, %s208, 128, 128, 8
        $region28: #{tpu_custom_call.1} parent=15 // pred_fallthru
          _
      $region16: #{tpu_custom_call.1} parent=5 // pred_fallthru
        _
      %p227 = scmp.le.s32.totalorder 1, %s16
      %p228 = scmp.lt.s32.totalorder %s16, 3
      %p229 = pnand %p227, %p228
      %p230 = pneg %p229
      // Predicated region
      $region29: #{tpu_custom_call.1} parent=5 // pred_check
        _
      $region30: #{tpu_custom_call.1} parent=5 // pred_check_branch
        %232 = sbr.rel (%p229) target = $region32
      $region31: #{tpu_custom_call.1} parent=5 // pred_region
        %s233 = ssub.s32 %s16, 1
        %s234 = sand.u32 %s45, 1
        %s235 = scalar_lea.sflag [#allocation8], %s234
        %s236 = sand.u32 %s45, 1
        %s237 = smul.addr %s236, 16
        %s238 = scalar_lea.vmem [#allocation7], %s237
        // Predicated region
        $region33: #{tpu_custom_call.1} parent=31 // pred_check
          %p239 = pneg %p58
        $region34: #{tpu_custom_call.1} parent=31 // pred_check_branch
          %241 = sbr.rel (%p239) target = $region36
        $region35: #{tpu_custom_call.1} parent=31 // pred_region
          %242 = dma.done %s235, 256
        $region36: #{tpu_custom_call.1} parent=31 // pred_fallthru
          _
        %s243 = sand.u32 %s21, 1
        %s244 = scalar_lea.sflag [#allocation11], %s243
        %s245 = sand.u32 %s75, 1
        %s246 = smul.addr %s245, 16
        %s247 = scalar_lea.vmem [#allocation10], %s246
        // Predicated region
        $region37: #{tpu_custom_call.1} parent=31 // pred_check
          %p248 = pneg %p88
        $region38: #{tpu_custom_call.1} parent=31 // pred_check_branch
          %250 = sbr.rel (%p248) target = $region40
        $region39: #{tpu_custom_call.1} parent=31 // pred_region
          %251 = dma.done %s244, 256
        $region40: #{tpu_custom_call.1} parent=31 // pred_fallthru
          _
        %s252 = sand.u32 %s21, 1
        %s253 = scalar_lea.sflag [#allocation11], %s252
        %s254 = sand.u32 %s105, 1
        %s255 = smul.addr %s254, 16
        %s256 = scalar_lea.vmem [#allocation12], %s255
        // Predicated region
        $region41: #{tpu_custom_call.1} parent=31 // pred_check
          %p257 = pneg %p118
        $region42: #{tpu_custom_call.1} parent=31 // pred_check_branch
          %259 = sbr.rel (%p257) target = $region44
        $region43: #{tpu_custom_call.1} parent=31 // pred_region
          %260 = dma.done %s253, 256
        $region44: #{tpu_custom_call.1} parent=31 // pred_fallthru
          _
        %s261 = sand.u32 %s45, 1
        %s262 = scalar_lea.sflag [#allocation8], %s261
        %s263 = sand.u32 %s45, 1
        %s264 = smul.addr %s263, 16
        %s265 = scalar_lea.vmem [#allocation7], %s264
        %p266 = pneg %p58
        %p267 = pneg %p55
        %s268 = sand.u32 %s21, 1
        %s269 = scalar_lea.sflag [#allocation11], %s268
        %s270 = sand.u32 %s75, 1
        %s271 = smul.addr %s270, 16
        %s272 = scalar_lea.vmem [#allocation10], %s271
        %p273 = pneg %p88
        %p274 = pneg %p85
        %s275 = sand.u32 %s21, 1
        %s276 = scalar_lea.sflag [#allocation11], %s275
        %s277 = sand.u32 %s105, 1
        %s278 = smul.addr %s277, 16
        %s279 = scalar_lea.vmem [#allocation12], %s278
        %p280 = pneg %p118
        %p281 = pneg %p115
        %p282 = pneg %p139
        %p283 = pneg %p136
        %s284 = ssub.s32 1, %s25
        %s285 = smul.u32 %s284, %s26
        %s286 = smul.u32 2, %s285
        %s287 = ssub.s32 1, %s25
        %s288 = smul.u32 %s287, %s26
        %s289 = smul.u32 2, %s288
        %s290 = ssub.s32 1, %s25
        %s291 = smul.u32 %s290, %s26
        %s292 = smul.u32 2, %s291
        %p293 = scmp.eq.s32.totalorder %s25, 0
        %p294 = scmp.eq.s32.totalorder %s26, 0
        %p295 = pnand %p293, %p294
        %p296 = pneg %p295
        // Predicated region
        $region45: #{tpu_custom_call.1} parent=31 // pred_check
          _
        $region46: #{tpu_custom_call.1} parent=31 // pred_check_branch
          %298 = sbr.rel (%p295) target = $region48
        $region47: #{tpu_custom_call.1} parent=31 // pred_region
          %299 = vst [vmem:[#allocation2] sm:$0xff] 0.0
          %300 = vst [vmem:[#allocation2 + $0x8] sm:$0xff] 0.0
          %301 = vst [vmem:[#allocation3] sm:$0xff] 0.0
          %302 = vst [vmem:[#allocation3 + $0x8] sm:$0xff] 0.0
          %303 = vst [vmem:[#allocation4] sm:$0xff] 0.0
          %304 = vst [vmem:[#allocation4 + $0x8] sm:$0xff] 0.0
        $region48: #{tpu_custom_call.1} parent=31 // pred_fallthru
          _
        // Predicated region
        $region49: #{tpu_custom_call.1} parent=31 // pred_check
          %p305 = pneg %p293
        $region50: #{tpu_custom_call.1} parent=31 // pred_check_branch
          %307 = sbr.rel (%p305) target = $region52
        $region51: #{tpu_custom_call.1} parent=31 // pred_region
          %v308 = vld [vmem:[%s238] sm:$0xff]
          %v309 = vld [vmem:[%s238 + $0x8] sm:$0xff]
          %v310 = vld [vmem:[%s247] sm:$0xff]
          %v311 = vld [vmem:[%s247 + $0x8] sm:$0xff]
          %v312 = vld [vmem:[%s256] sm:$0xff]
          %v313 = vld [vmem:[%s256 + $0x8] sm:$0xff]
          %314 = vst [vmem:[#allocation6] sm:$0xff] %v308
          %315 = vst [vmem:[#allocation6 + $0x8] sm:$0xff] %v309
          %v316 = vsub.f32 %v308, %v310
          %v317 = vsub.f32 %v309, %v311
          %v318 = vsub.f32 %v308, %v312
          %v319 = vsub.f32 %v309, %v313
          %v320 = vmul.f32 %v316, %v316
          %v321 = vmul.f32 %v317, %v317
          %v322 = vmul.f32 %v318, %v318
          %v323 = vmul.f32 %v319, %v319
          %v324 = vld [vmem:[#allocation2] sm:$0xff]
          %v325 = vld [vmem:[#allocation2 + $0x8] sm:$0xff]
          %v326 = vadd.f32 %v324, %v308
          %v327 = vadd.f32 %v325, %v309
          %328 = vst [vmem:[#allocation2] sm:$0xff] %v326
          %329 = vst [vmem:[#allocation2 + $0x8] sm:$0xff] %v327
          %v330 = vld [vmem:[#allocation3] sm:$0xff]
          %v331 = vld [vmem:[#allocation3 + $0x8] sm:$0xff]
          %v332 = vadd.f32 %v330, %v320
          %v333 = vadd.f32 %v331, %v321
          %334 = vst [vmem:[#allocation3] sm:$0xff] %v332
          %335 = vst [vmem:[#allocation3 + $0x8] sm:$0xff] %v333
          %v336 = vld [vmem:[#allocation4] sm:$0xff]
          %v337 = vld [vmem:[#allocation4 + $0x8] sm:$0xff]
          %v338 = vadd.f32 %v336, %v322
          %v339 = vadd.f32 %v337, %v323
          %340 = vst [vmem:[#allocation4] sm:$0xff] %v338
          %341 = vst [vmem:[#allocation4 + $0x8] sm:$0xff] %v339
        $region52: #{tpu_custom_call.1} parent=31 // pred_fallthru
          _
        // Predicated region
        $region53: #{tpu_custom_call.1} parent=31 // pred_check
          _
        $region54: #{tpu_custom_call.1} parent=31 // pred_check_branch
          %343 = sbr.rel (%p295) target = $region56
        $region55: #{tpu_custom_call.1} parent=31 // pred_region
          %v344 = vld [vmem:[#allocation2] sm:$0xff]
          %v345 = vld [vmem:[#allocation2 + $0x8] sm:$0xff]
          %v346 = vadd.f32 %v344, %v345
          %347 = vadd.xlane.f32.xlu0 %v346
          %v348 = vpop.xlane.xlu0 %347
          %v349 = vrot.slane %v348, 4
          %v350 = vadd.f32 %v348, %v349
          %v351 = vrot.slane %v350, 2
          %v352 = vadd.f32 %v350, %v351
          %v353 = vrot.slane %v352, 1
          %v354 = vadd.f32 %v352, %v353
          %s355 = vtos %v354
          %s356 = scalar_lea.smem [#allocation5], 0
          %357 = sst [smem:[%s356]] %s355
          %v358 = vld [vmem:[#allocation3] sm:$0xff]
          %v359 = vld [vmem:[#allocation3 + $0x8] sm:$0xff]
          %v360 = vadd.f32 %v358, %v359
          %361 = vadd.xlane.f32.xlu0 %v360
          %v362 = vpop.xlane.xlu0 %361
          %v363 = vrot.slane %v362, 4
          %v364 = vadd.f32 %v362, %v363
          %v365 = vrot.slane %v364, 2
          %v366 = vadd.f32 %v364, %v365
          %v367 = vrot.slane %v366, 1
          %v368 = vadd.f32 %v366, %v367
          %s369 = vtos %v368
          %s370 = scalar_lea.smem [#allocation5], 1
          %371 = sst [smem:[%s370]] %s369
          %v372 = vld [vmem:[#allocation4] sm:$0xff]
          %v373 = vld [vmem:[#allocation4 + $0x8] sm:$0xff]
          %v374 = vadd.f32 %v372, %v373
          %375 = vadd.xlane.f32.xlu0 %v374
          %v376 = vpop.xlane.xlu0 %375
          %v377 = vrot.slane %v376, 4
          %v378 = vadd.f32 %v376, %v377
          %v379 = vrot.slane %v378, 2
          %v380 = vadd.f32 %v378, %v379
          %v381 = vrot.slane %v380, 1
          %v382 = vadd.f32 %v380, %v381
          %s383 = vtos %v382
          %s384 = scalar_lea.smem [#allocation5], 2
          %385 = sst [smem:[%s384]] %s383
        $region56: #{tpu_custom_call.1} parent=31 // pred_fallthru
          _
        %p386 = scmp.eq.s32.totalorder %s25, 1
        %p387 = pnand %p386, %p294
        %p388 = pneg %p387
        // Predicated region
        $region57: #{tpu_custom_call.1} parent=31 // pred_check
          _
        $region58: #{tpu_custom_call.1} parent=31 // pred_check_branch
          %390 = sbr.rel (%p387) target = $region60
        $region59: #{tpu_custom_call.1} parent=31 // pred_region
          %391 = vst [vmem:[#allocation2] sm:$0xff] 0.0
          %392 = vst [vmem:[#allocation2 + $0x8] sm:$0xff] 0.0
        $region60: #{tpu_custom_call.1} parent=31 // pred_fallthru
          _
        // Predicated region
        $region61: #{tpu_custom_call.1} parent=31 // pred_check
          %p393 = pneg %p386
        $region62: #{tpu_custom_call.1} parent=31 // pred_check_branch
          %395 = sbr.rel (%p393) target = $region64
        $region63: #{tpu_custom_call.1} parent=31 // pred_region
          %v396 = vld [vmem:[#allocation6] sm:$0xff]
          %v397 = vld [vmem:[#allocation6 + $0x8] sm:$0xff]
          %s398 = sld [smem:[#allocation5]]
          %s399 = smul.f32 %s398, 0.00048828125
          %v400 = vstv %s399
          %v401 = vsub.f32 %v396, %v400
          %v402 = vsub.f32 %v397, %v400
          %v403 = vand.u32 2147483647, %v401
          %v404 = vand.u32 2147483647, %v402
          %vm405 = vcmp.lt.f32.partialorder %v403, 0.3
          %vm406 = vcmp.lt.f32.partialorder %v404, 0.3
          %v407 = vsel %vm405, 1, 0
          %v408 = vsel %vm406, 1, 0
          %v409 = vcvt.s32.f32 %v407
          %v410 = vcvt.s32.f32 %v408
          %v411 = vld [vmem:[#allocation2] sm:$0xff]
          %v412 = vld [vmem:[#allocation2 + $0x8] sm:$0xff]
          %v413 = vadd.f32 %v411, %v409
          %v414 = vadd.f32 %v412, %v410
          %415 = vst [vmem:[#allocation2] sm:$0xff] %v413
          %416 = vst [vmem:[#allocation2 + $0x8] sm:$0xff] %v414
        $region64: #{tpu_custom_call.1} parent=31 // pred_fallthru
          _
        // Predicated region
        $region65: #{tpu_custom_call.1} parent=31 // pred_check
          _
        $region66: #{tpu_custom_call.1} parent=31 // pred_check_branch
          %418 = sbr.rel (%p387) target = $region68
        $region67: #{tpu_custom_call.1} parent=31 // pred_region
          %v419 = vld [vmem:[#allocation2] sm:$0xff]
          %v420 = vld [vmem:[#allocation2 + $0x8] sm:$0xff]
          %v421 = vadd.f32 %v419, %v420
          %422 = vadd.xlane.f32.xlu0 %v421
          %v423 = vpop.xlane.xlu0 %422
          %v424 = vrot.slane %v423, 4
          %v425 = vadd.f32 %v423, %v424
          %v426 = vrot.slane %v425, 2
          %v427 = vadd.f32 %v425, %v426
          %v428 = vrot.slane %v427, 1
          %v429 = vadd.f32 %v427, %v428
          %s430 = vtos %v429
          %s431 = sld [smem:[#allocation5 + $0x1]]
          %s432 = smul.f32 %s431, 0.00048828125
          %s433 = sld [smem:[#allocation5 + $0x2]]
          %s434 = smul.f32 %s433, 0.00048828125
          %s435 = smul.f32 %s430, %s432
          %s436 = ssub.f32 2048.0, %s430
          %s437 = smul.f32 %s436, %s434
          %s438 = sadd.f32 %s435, %s437
          %s439 = smul.f32 %s438, 0.00048828125
          %s440 = scalar_lea.smem [#allocation13], 0
          %441 = sst [smem:[%s440]] %s439
        $region68: #{tpu_custom_call.1} parent=31 // pred_fallthru
          _
        // Predicated region
        $region69: #{tpu_custom_call.1} parent=31 // pred_check
          %p442 = pneg %p136
        $region70: #{tpu_custom_call.1} parent=31 // pred_check_branch
          %444 = sbr.rel (%p442) target = $region72
        $region71: #{tpu_custom_call.1} parent=31 // pred_region
          %s446 = ssub.s32 16, 16
          %447 = vsyncadd [#allocation9], %s446
          %450 = dma.smem_to_hbm [#allocation13], 16, %s3, [#allocation9]
        $region72: #{tpu_custom_call.1} parent=31 // pred_fallthru
          _
        // Predicated region
        $region73: #{tpu_custom_call.1} parent=31 // pred_check
          %p451 = pneg %p136
        $region74: #{tpu_custom_call.1} parent=31 // pred_check_branch
          %453 = sbr.rel (%p451) target = $region76
        $region75: #{tpu_custom_call.1} parent=31 // pred_region
          %454 = dma.done [#allocation9], 16
        $region76: #{tpu_custom_call.1} parent=31 // pred_fallthru
          _
        %455 = sfence
      $region32: #{tpu_custom_call.1} parent=5 // pred_fallthru
        _
      %p456 = scmp.le.s32.totalorder 2, %s16
      // Predicated region
      $region77: #{tpu_custom_call.1} parent=5 // pred_check
        %p457 = pneg %p456
      $region78: #{tpu_custom_call.1} parent=5 // pred_check_branch
        %459 = sbr.rel (%p457) target = $region80
      $region79: #{tpu_custom_call.1} parent=5 // pred_region
        %s460 = ssub.s32 %s16, 2
      $region80: #{tpu_custom_call.1} parent=5 // pred_fallthru
        _
    $region6: #{tpu_custom_call.1} parent=1 // loop_footer
      %s20 = sadd.s32 1, %s16
    $region7: #{tpu_custom_call.1} parent=1 // loop_footer_branch
      %15 = sbr.rel target = $region3
    $region8: #{tpu_custom_call.1} parent=1 // loop_exit
      _
    %461 = vsyncpa [#allocation8], 1
    %s462 = scalar_lea.sflag [#allocation8], 1
    %463 = vsyncpa %s462, 1
    %464 = vsyncpa [#allocation11], 1
    %s465 = scalar_lea.sflag [#allocation11], 1
    %466 = vsyncpa %s465, 1
    %467 = vsyncpa [#allocation9], 1
    %s468 = scalar_lea.sflag [#allocation9], 1
    %469 = vsyncpa %s468, 1

</llo_original>
